<compile_context>
chip_gen: v5e
topology: v5e:2x2
jax: 0.10.0
libtpu: 0.0.40
codegen_flags: <defaults>
</compile_context>

<pallas_src>
import functools

import jax
import jax.numpy as jnp
from jax import lax
from jax.experimental import pallas as pl
from jax.experimental.pallas import tpu as pltpu


# ---------------------------------------------------------------------------
# In-kernel math helpers (power is static; all branches resolve at trace time)
# ---------------------------------------------------------------------------
def _pow_p(v, power):
    """v ** power using VPU multiplies for integer exponents (no exp/log)."""
    if isinstance(power, int):
        if power == 1:
            return v
        if power == 2:
            return v * v
        return lax.integer_pow(v, power)
    # TODO(synk): non-integer p keeps the transcendental pow (matches the
    # literal torch x.pow semantics, incl. NaN for negative bases).
    return jnp.power(v, power)


def _inv_root(s, power):
    """s ** (-1/power): at most one transcendental per spatial element."""
    if power == 2:
        return lax.rsqrt(s)
    if power == 1:
        return 1.0 / s
    if power == 4:
        return lax.rsqrt(lax.sqrt(s))
    return jnp.power(s, -1.0 / power)


def _normalize_kernel(x_ref, o_ref, *, power, per_channel):
    """Block shapes:
         4-D layout: (1, C, ts, 128)  -- spatial on (sublane, lane) dims
         3-D layout: (1, C, thw)      -- fallback when HW % 128 != 0
    """
    C = x_ref.shape[1]
    if per_channel:
        # Per-channel accumulation: each channel plane is a dense spatial tile
        # and the f32 accumulation never materializes a full-tile upcast.
        s = _pow_p(x_ref[0, 0].astype(jnp.float32), power)
        for c in range(1, C):
            s = s + _pow_p(x_ref[0, c].astype(jnp.float32), power)
        inv = _inv_root(s, power)
        for c in range(C):
            xc = x_ref[0, c].astype(jnp.float32)
            o_ref[0, c] = (xc * inv).astype(o_ref.dtype)
    else:
        x = x_ref[...].astype(jnp.float32)
        s = jnp.sum(_pow_p(x, power), axis=1, keepdims=True)
        inv = _inv_root(s, power)
        o_ref[...] = (x * inv).astype(o_ref.dtype)


# ---------------------------------------------------------------------------
# Host-side tiling helpers
# ---------------------------------------------------------------------------
def _cdiv(a, b):
    return -(-a // b)


def _vmem_capacity_bytes():
    try:
        cap = getattr(pltpu.get_tpu_info(), "vmem_capacity_bytes", None)
        if cap:
            return int(cap)
    except Exception:
        pass
    return 128 * 1024 * 1024  # v5e / v6e default


def _choose_rows(C, S, itemsize, n_batch, target_bytes):
    """Rows (of 128 lanes) per block for the (N, C, S, 128) layout."""
    bytes_per_row = C * 128 * itemsize
    max_rows = max(1, target_bytes // bytes_per_row)
    ts = S if S <= max_rows else max(8, (max_rows // 8) * 8)
    # keep >= ~8 grid steps so DMA/compute overlap and both v7x TCs get work
    while ts > 8 and n_batch * _cdiv(S, ts) < 8:
        ts = max(8, ((ts // 2) // 8) * 8)
    return ts


def _choose_lanes(C, HW, itemsize, n_batch, target_bytes):
    """Lane tile for the fallback (N, C, HW) layout (HW % 128 != 0)."""
    if HW <= 128:
        return HW
    max_lanes = max(128, (target_bytes // (C * itemsize)) // 128 * 128)
    thw = min(max_lanes, max(128, (HW // 128) * 128))
    while thw > 128 and n_batch * _cdiv(HW, thw) < 8:
        thw = max(128, ((thw // 2) // 128) * 128)
    return thw


# ---------------------------------------------------------------------------
# Wrapper
# ---------------------------------------------------------------------------
def normalize(x, power=2):
    """Pallas TPU implementation of x / x.pow(p).sum(1, keepdim=True).pow(1/p)."""
    N, C, H, W = x.shape
    HW = H * W

    # Normalize the exponent type so integer powers hit the VPU fast path.
    try:
        p = int(power) if float(power).is_integer() else float(power)
    except TypeError:
        p = power

    itemsize = jnp.dtype(x.dtype).itemsize
    vmem_cap = _vmem_capacity_bytes()
    # per-generation tile target: smaller on v7x (64 MiB VMEM per TC)
    target_bytes = 4 * 2**20 if vmem_cap <= 64 * 2**20 else 8 * 2**20

    if HW % 128 == 0:
        # Preferred layout: spatial on the last two dims; C reduced across
        # dense vreg planes (no sublane waste for small C).
        S = HW // 128
        ts = _choose_rows(C, S, itemsize, N, target_bytes)
        x_r = x.reshape(N, C, S, 128)
        grid = (N, _cdiv(S, ts))
        block = (1, C, ts, 128)
        index_map = lambda i, j: (i, 0, j, 0)
        block_bytes = C * ts * 128 * itemsize
        plane_f32 = ts * 128 * 4
        per_channel = C <= 64
        out_struct = jax.ShapeDtypeStruct((N, C, S, 128), x.dtype)
    else:
        thw = _choose_lanes(C, HW, itemsize, N, target_bytes)
        x_r = x.reshape(N, C, HW)
        grid = (N, _cdiv(HW, thw))
        block = (1, C, thw)
        index_map = lambda i, j: (i, 0, j)
        block_bytes = C * thw * itemsize
        plane_f32 = thw * 4
        per_channel = False  # keep the simple vectorized path in the fallback
        out_struct = jax.ShapeDtypeStruct((N, C, HW), x.dtype)

    # VMEM budget: double-buffered input + output blocks, plus f32 temps
    # (a few spatial planes in the per-channel path, a full upcast otherwise),
    # plus slack for Mosaic internal scratch; never above physical capacity.
    if per_channel:
        temp_bytes = 4 * plane_f32
    else:
        temp_bytes = block_bytes * max(1, 4 // itemsize)
    vmem_limit = int(min(vmem_cap,
                         max(32 * 2**20, 4 * block_bytes + temp_bytes + 4 * 2**20)))

    kernel = functools.partial(_normalize_kernel, power=p, per_channel=per_channel)

    out_r = pl.pallas_call(
        kernel,
        out_shape=out_struct,
        grid_spec=pltpu.PrefetchScalarGridSpec(
            num_scalar_prefetch=0,
            grid=grid,
            in_specs=[pl.BlockSpec(block, index_map)],
            out_specs=pl.BlockSpec(block, index_map),
        ),
        compiler_params=pltpu.CompilerParams(
            # both axes independent -> shard across v7x's two TensorCores
            dimension_semantics=("parallel", "parallel"),
            vmem_limit_bytes=vmem_limit,
        ),
    )(x_r)

    return out_r.reshape(N, C, H, W)


if __name__ == "__main__":
    key = jax.random.PRNGKey(0)
    N, C, H, W = 2, 4, 16, 16
    x = jax.random.normal(key, (N, C, H, W), dtype=jnp.float32)

    # p = 2 fast path (rsqrt)
    out = jax.block_until_ready(normalize(x, power=2))
    norm_ref = jnp.power(jnp.sum(jnp.power(x, 2), axis=1, keepdims=True), 0.5)
    ref = x / norm_ref
    assert out.shape == x.shape and out.dtype == x.dtype
    assert jnp.allclose(out, ref, atol=1e-5, rtol=1e-5)

    # general-p path (integer exponent -> VPU multiplies, inv-root on EUP);
    # positive inputs so the literal reference is NaN-free.
    xp = jnp.abs(x) + 0.5
    out3 = jax.block_until_ready(normalize(xp, power=3))
    ref3 = xp / jnp.power(jnp.sum(jnp.power(xp, 3), axis=1, keepdims=True), 1.0 / 3.0)
    assert jnp.allclose(out3, ref3, atol=1e-5, rtol=2e-4)

    print("KERNEL_OK")
</pallas_src>

<mosaic_0001>
module attributes {stable_mosaic.version = 11 : i64} {
  func.func @_normalize_kernel(%arg0: i32, %arg1: i32, %arg2: memref<1x4x2x128xf32, #tpu.memory_space<vmem>>, %arg3: memref<1x4x2x128xf32, #tpu.memory_space<vmem>>) attributes {dimension_semantics = [#tpu.dimension_semantics<parallel>, #tpu.dimension_semantics<parallel>], iteration_bounds = array<i64: 2, 1>, scalar_prefetch = 0 : i64, scratch_operands = 0 : i64, tpu.core_type = #tpu.core_type<tc>, window_params = [{transform_indices = @transform_0, window_bounds = array<i64: 1, 4, 2, 128>}, {transform_indices = @transform_1, window_bounds = array<i64: 1, 4, 2, 128>}]} {
    %c0 = arith.constant 0 : index
    %c0_0 = arith.constant 0 : index
    %c0_1 = arith.constant 0 : index
    %c0_2 = arith.constant 0 : index
    %0 = vector.load %arg2[%c0, %c0_0, %c0_1, %c0_2] : memref<1x4x2x128xf32, #tpu.memory_space<vmem>>, vector<1x1x2x128xf32>
    %1 = vector.shape_cast %0 : vector<1x1x2x128xf32> to vector<2x128xf32>
    %2 = arith.mulf %1, %1 : vector<2x128xf32>
    %c0_3 = arith.constant 0 : index
    %c1 = arith.constant 1 : index
    %c0_4 = arith.constant 0 : index
    %c0_5 = arith.constant 0 : index
    %3 = vector.load %arg2[%c0_3, %c1, %c0_4, %c0_5] : memref<1x4x2x128xf32, #tpu.memory_space<vmem>>, vector<1x1x2x128xf32>
    %4 = vector.shape_cast %3 : vector<1x1x2x128xf32> to vector<2x128xf32>
    %5 = arith.mulf %4, %4 : vector<2x128xf32>
    %6 = arith.addf %2, %5 : vector<2x128xf32>
    %c0_6 = arith.constant 0 : index
    %c2 = arith.constant 2 : index
    %c0_7 = arith.constant 0 : index
    %c0_8 = arith.constant 0 : index
    %7 = vector.load %arg2[%c0_6, %c2, %c0_7, %c0_8] : memref<1x4x2x128xf32, #tpu.memory_space<vmem>>, vector<1x1x2x128xf32>
    %8 = vector.shape_cast %7 : vector<1x1x2x128xf32> to vector<2x128xf32>
    %9 = arith.mulf %8, %8 : vector<2x128xf32>
    %10 = arith.addf %6, %9 : vector<2x128xf32>
    %c0_9 = arith.constant 0 : index
    %c3 = arith.constant 3 : index
    %c0_10 = arith.constant 0 : index
    %c0_11 = arith.constant 0 : index
    %11 = vector.load %arg2[%c0_9, %c3, %c0_10, %c0_11] : memref<1x4x2x128xf32, #tpu.memory_space<vmem>>, vector<1x1x2x128xf32>
    %12 = vector.shape_cast %11 : vector<1x1x2x128xf32> to vector<2x128xf32>
    %13 = arith.mulf %12, %12 : vector<2x128xf32>
    %14 = arith.addf %10, %13 : vector<2x128xf32>
    %15 = math.rsqrt %14 : vector<2x128xf32>
    %c0_12 = arith.constant 0 : index
    %c0_13 = arith.constant 0 : index
    %c0_14 = arith.constant 0 : index
    %c0_15 = arith.constant 0 : index
    %16 = vector.load %arg2[%c0_12, %c0_13, %c0_14, %c0_15] : memref<1x4x2x128xf32, #tpu.memory_space<vmem>>, vector<1x1x2x128xf32>
    %17 = vector.shape_cast %16 : vector<1x1x2x128xf32> to vector<2x128xf32>
    %18 = arith.mulf %17, %15 : vector<2x128xf32>
    %c0_16 = arith.constant 0 : index
    %c0_17 = arith.constant 0 : index
    %c0_18 = arith.constant 0 : index
    %c0_19 = arith.constant 0 : index
    %19 = vector.load %arg3[%c0_16, %c0_17, %c0_18, %c0_19] : memref<1x4x2x128xf32, #tpu.memory_space<vmem>>, vector<1x1x2x128xf32>
    %20 = vector.shape_cast %19 : vector<1x1x2x128xf32> to vector<2x128xf32>
    %21 = vector.shape_cast %18 : vector<2x128xf32> to vector<1x1x2x128xf32>
    tpu.vector_store %arg3[%c0_16, %c0_17, %c0_18, %c0_19], %21 {strides = array<i32>} : memref<1x4x2x128xf32, #tpu.memory_space<vmem>>, vector<1x1x2x128xf32>,
    %c0_20 = arith.constant 0 : index
    %c1_21 = arith.constant 1 : index
    %c0_22 = arith.constant 0 : index
    %c0_23 = arith.constant 0 : index
    %22 = vector.load %arg2[%c0_20, %c1_21, %c0_22, %c0_23] : memref<1x4x2x128xf32, #tpu.memory_space<vmem>>, vector<1x1x2x128xf32>
    %23 = vector.shape_cast %22 : vector<1x1x2x128xf32> to vector<2x128xf32>
    %24 = arith.mulf %23, %15 : vector<2x128xf32>
    %c0_24 = arith.constant 0 : index
    %c1_25 = arith.constant 1 : index
    %c0_26 = arith.constant 0 : index
    %c0_27 = arith.constant 0 : index
    %25 = vector.load %arg3[%c0_24, %c1_25, %c0_26, %c0_27] : memref<1x4x2x128xf32, #tpu.memory_space<vmem>>, vector<1x1x2x128xf32>
    %26 = vector.shape_cast %25 : vector<1x1x2x128xf32> to vector<2x128xf32>
    %27 = vector.shape_cast %24 : vector<2x128xf32> to vector<1x1x2x128xf32>
    tpu.vector_store %arg3[%c0_24, %c1_25, %c0_26, %c0_27], %27 {strides = array<i32>} : memref<1x4x2x128xf32, #tpu.memory_space<vmem>>, vector<1x1x2x128xf32>,
    %c0_28 = arith.constant 0 : index
    %c2_29 = arith.constant 2 : index
    %c0_30 = arith.constant 0 : index
    %c0_31 = arith.constant 0 : index
    %28 = vector.load %arg2[%c0_28, %c2_29, %c0_30, %c0_31] : memref<1x4x2x128xf32, #tpu.memory_space<vmem>>, vector<1x1x2x128xf32>
    %29 = vector.shape_cast %28 : vector<1x1x2x128xf32> to vector<2x128xf32>
    %30 = arith.mulf %29, %15 : vector<2x128xf32>
    %c0_32 = arith.constant 0 : index
    %c2_33 = arith.constant 2 : index
    %c0_34 = arith.constant 0 : index
    %c0_35 = arith.constant 0 : index
    %31 = vector.load %arg3[%c0_32, %c2_33, %c0_34, %c0_35] : memref<1x4x2x128xf32, #tpu.memory_space<vmem>>, vector<1x1x2x128xf32>
    %32 = vector.shape_cast %31 : vector<1x1x2x128xf32> to vector<2x128xf32>
    %33 = vector.shape_cast %30 : vector<2x128xf32> to vector<1x1x2x128xf32>
    tpu.vector_store %arg3[%c0_32, %c2_33, %c0_34, %c0_35], %33 {strides = array<i32>} : memref<1x4x2x128xf32, #tpu.memory_space<vmem>>, vector<1x1x2x128xf32>,
    %c0_36 = arith.constant 0 : index
    %c3_37 = arith.constant 3 : index
    %c0_38 = arith.constant 0 : index
    %c0_39 = arith.constant 0 : index
    %34 = vector.load %arg2[%c0_36, %c3_37, %c0_38, %c0_39] : memref<1x4x2x128xf32, #tpu.memory_space<vmem>>, vector<1x1x2x128xf32>
    %35 = vector.shape_cast %34 : vector<1x1x2x128xf32> to vector<2x128xf32>
    %36 = arith.mulf %35, %15 : vector<2x128xf32>
    %c0_40 = arith.constant 0 : index
    %c3_41 = arith.constant 3 : index
    %c0_42 = arith.constant 0 : index
    %c0_43 = arith.constant 0 : index
    %37 = vector.load %arg3[%c0_40, %c3_41, %c0_42, %c0_43] : memref<1x4x2x128xf32, #tpu.memory_space<vmem>>, vector<1x1x2x128xf32>
    %38 = vector.shape_cast %37 : vector<1x1x2x128xf32> to vector<2x128xf32>
    %39 = vector.shape_cast %36 : vector<2x128xf32> to vector<1x1x2x128xf32>
    tpu.vector_store %arg3[%c0_40, %c3_41, %c0_42, %c0_43], %39 {strides = array<i32>} : memref<1x4x2x128xf32, #tpu.memory_space<vmem>>, vector<1x1x2x128xf32>,
    return
  }
  func.func @transform_0(%arg0: i32, %arg1: i32) -> (i32, i32, i32, i32) {
    %c0_i32 = arith.constant 0 : i32
    %c0_i32_0 = arith.constant 0 : i32
    %c0_i32_1 = arith.constant 0 : i32
    return %arg0, %c0_i32, %arg1, %c0_i32_0 : i32, i32, i32, i32
  }
  func.func @transform_1(%arg0: i32, %arg1: i32) -> (i32, i32, i32, i32) {
    %c0_i32 = arith.constant 0 : i32
    %c0_i32_0 = arith.constant 0 : i32
    %c0_i32_1 = arith.constant 0 : i32
    return %arg0, %c0_i32, %arg1, %c0_i32_0 : i32, i32, i32, i32
  }
}

</mosaic_0001>

<llo_original>
// kernel: tpu_custom_call.1
$region0: #{tpu_custom_call.1}
  #allocation0 [shape = 'u32[]', space=smem, size = 0x4, offset = 0x4, fixed_abs, tag = 'smem constant byte address 0x4 - core index']
  #allocation1 [shape = 'u32[72,128]{1,0:T(1,128)}', space=vmem, size = 0x9000, scoped, tag = 'internal scratch']
  %s0 = inlined_call_operand.hbm [shape: f32[2,4,2,128], index: 0, kind: input, shape index: {}]
  %s1 = inlined_call_operand.hbm [shape: f32[2,4,2,128], index: 1, kind: output, shape index: {}]
  %s2 = sld [smem:[#allocation0]]
  $region41: #{tpu_custom_call.1} parent=0
    _
  %s4 = ssub.s32 1, %s2
  %s5 = scalar_select 0, %s4, %s2
  $region1: #{tpu_custom_call.1} parent=0
    #allocation2 [shape = 'u8[8192]{0}', space=vmem, size = 0x2000, scoped, tag = 'input window, operand 0']
    #allocation3 [shape = 's32[2]{0}', space=sflag, size = 0x8, scoped, tag = 'scoped memory for tpu_custom_call.1']
    #allocation4 [shape = 's32[2]{0}', space=sflag, size = 0x8, scoped, tag = 'scoped memory for tpu_custom_call.1']
    #allocation5 [shape = 'u8[8192]{0}', space=vmem, size = 0x2000, scoped, tag = 'output window, operand 0']
    %6 = vsyncpa [#allocation3], 0
    %s7 = scalar_lea.sflag [#allocation3], 1
    %8 = vsyncpa %s7, 0
    %9 = vsyncpa [#allocation4], 0
    %s10 = scalar_lea.sflag [#allocation4], 1
    %11 = vsyncpa %s10, 0
    loop: start=0, step=1, limit=4
    $region2: #{tpu_custom_call.1} parent=1 // loop_pre_header
      _
    $region3: #{tpu_custom_call.1} parent=1 // loop_header
      %s13 = sphi 0, %s17
      %p14 = scmp.ge.s32.totalorder %s13, 4
      %s20 = sphi 0, %s32
      %s21 = sphi 0, %s28
      %s22 = sphi 0, %s20
      %s23 = sphi 0, %s21
      %s24 = sphi 0, %s22
      %s25 = sphi 0, %s23
      %s37 = sphi 0, %s39
      %s40 = sphi 0, %s37
      %s41 = sphi 0, %s40
      %s57 = sphi 0, %s41
      %s65 = sphi 0, %s67
      %s68 = sphi 0, %s65
      %s69 = sphi 0, %s68
      %s85 = sphi 0, %s69
    $region4: #{tpu_custom_call.1} parent=1 // loop_header_branch
      %16 = sbr.rel (%p14) target = $region8
    $region5: #{tpu_custom_call.1} parent=1 // loop_body
      %s18 = ssub.s32 %s13, 1
      %s19 = ssub.s32 %s13, 2
      %s26 = sadd.s32 1, %s21
      %p27 = scmp.ge.s32.totalorder %s26, 1
      %s28 = scalar_select %p27, 0, %s26
      %s29 = sadd.s32 1, %s20
      %s30 = scalar_select %p27, %s29, %s20
      %p31 = scmp.ge.s32.totalorder %s30, 2
      %s32 = scalar_select %p31, 0, %s30
      %s33 = ssub.s32 %s20, %s32
      %s34 = ssub.s32 %s21, %s28
      %s35 = sor.u32 %s33, %s34
      %p36 = scmp.eq.s32.totalorder %s35, 0
      %s38 = sadd.s32 %s37, 1
      %s39 = scalar_select %p36, %s37, %s38
      %p42 = pneg %p36
      %p43 = scmp.eq.s32.totalorder %s13, 1
      %p44 = por %p42, %p43
      %p45 = scmp.ne.s32.totalorder %s37, %s40
      %p46 = scmp.eq.s32.totalorder %s13, 0
      %p47 = por %p45, %p46
      %p48 = scmp.ne.s32.totalorder %s37, %s40
      %p49 = scmp.eq.s32.totalorder %s18, 1
      %p50 = por %p48, %p49
      %p51 = scmp.ne.s32.totalorder %s40, %s41
      %p52 = scmp.eq.s32.totalorder %s18, 0
      %p53 = por %p51, %p52
      %p54 = scmp.ne.s32.totalorder %s40, %s41
      %p55 = scmp.eq.s32.totalorder %s19, 1
      %p56 = por %p54, %p55
      %p58 = scmp.ne.s32.totalorder %s41, %s57
      %p59 = scmp.eq.s32.totalorder %s19, 0
      %p60 = por %p58, %p59
      %s61 = ssub.s32 %s20, %s32
      %s62 = ssub.s32 %s21, %s28
      %s63 = sor.u32 %s61, %s62
      %p64 = scmp.eq.s32.totalorder %s63, 0
      %s66 = sadd.s32 %s65, 1
      %s67 = scalar_select %p64, %s65, %s66
      %p70 = pneg %p64
      %p71 = scmp.eq.s32.totalorder %s13, 1
      %p72 = por %p70, %p71
      %p73 = scmp.ne.s32.totalorder %s65, %s68
      %p74 = scmp.eq.s32.totalorder %s13, 0
      %p75 = por %p73, %p74
      %p76 = scmp.ne.s32.totalorder %s65, %s68
      %p77 = scmp.eq.s32.totalorder %s18, 1
      %p78 = por %p76, %p77
      %p79 = scmp.ne.s32.totalorder %s68, %s69
      %p80 = scmp.eq.s32.totalorder %s18, 0
      %p81 = por %p79, %p80
      %p82 = scmp.ne.s32.totalorder %s68, %s69
      %p83 = scmp.eq.s32.totalorder %s19, 1
      %p84 = por %p82, %p83
      %p86 = scmp.ne.s32.totalorder %s69, %s85
      %p87 = scmp.eq.s32.totalorder %s19, 0
      %p88 = por %p86, %p87
      %p89 = scmp.le.s32.totalorder 1, %s13
      %p90 = scmp.lt.s32.totalorder %s13, 3
      %p91 = pnand %p89, %p90
      %p92 = pneg %p91
      // Predicated region
      $region9: #{tpu_custom_call.1} parent=5 // pred_check
        _
      $region10: #{tpu_custom_call.1} parent=5 // pred_check_branch
        %94 = sbr.rel (%p91) target = $region12
      $region11: #{tpu_custom_call.1} parent=5 // pred_region
        %s95 = ssub.s32 %s13, 1
      $region12: #{tpu_custom_call.1} parent=5 // pred_fallthru
        _
      %p96 = scmp.lt.s32.totalorder %s13, 2
      // Predicated region
      $region13: #{tpu_custom_call.1} parent=5 // pred_check
        %p97 = pneg %p96
      $region14: #{tpu_custom_call.1} parent=5 // pred_check_branch
        %99 = sbr.rel (%p97) target = $region16
      $region15: #{tpu_custom_call.1} parent=5 // pred_region
        // Predicated region
        $region17: #{tpu_custom_call.1} parent=15 // pred_check
          %p100 = pneg %p47
        $region18: #{tpu_custom_call.1} parent=15 // pred_check_branch
          %102 = sbr.rel (%p100) target = $region20
        $region19: #{tpu_custom_call.1} parent=15 // pred_region
          %s103 = sand.u32 %s37, 1
          %s104 = scalar_lea.sflag [#allocation3], %s103
          %s105 = sand.u32 %s37, 1
          %s106 = smul.addr %s105, 8
          %s107 = scalar_lea.vmem [#allocation2], %s106
          %109 = vsyncadd %s104, 0
          %s110 = smul.addr %s20, 4
          %s111 = sadd.s32 %s21, %s110
          %s112 = smul.addr %s111, 2
          %s113 = scalar_lea.hbm %s0, %s112
          %s114 = sshll.u32 %s113, 4
          %s115 = int_to_ptr.hbm [resolvable:$true] %s114
          %s116 = sshll.u32 %s107, 4
          %s117 = int_to_ptr.vmem [resolvable:$true] %s116
          %122 = dma.hbm_to_vmem [thread:$0]  %s115, 128, %s117, %s104, 32, 32, 2
        $region20: #{tpu_custom_call.1} parent=15 // pred_fallthru
          _
      $region16: #{tpu_custom_call.1} parent=5 // pred_fallthru
        _
      %p123 = scmp.le.s32.totalorder 1, %s13
      %p124 = scmp.lt.s32.totalorder %s13, 3
      %p125 = pnand %p123, %p124
      %p126 = pneg %p125
      // Predicated region
      $region21: #{tpu_custom_call.1} parent=5 // pred_check
        _
      $region22: #{tpu_custom_call.1} parent=5 // pred_check_branch
        %128 = sbr.rel (%p125) target = $region24
      $region23: #{tpu_custom_call.1} parent=5 // pred_region
        %s129 = ssub.s32 %s13, 1
        %s130 = sand.u32 %s40, 1
        %s131 = scalar_lea.sflag [#allocation3], %s130
        %s132 = sand.u32 %s40, 1
        %s133 = smul.addr %s132, 8
        %s134 = scalar_lea.vmem [#allocation2], %s133
        // Predicated region
        $region25: #{tpu_custom_call.1} parent=23 // pred_check
          %p135 = pneg %p53
        $region26: #{tpu_custom_call.1} parent=23 // pred_check_branch
          %137 = sbr.rel (%p135) target = $region28
        $region27: #{tpu_custom_call.1} parent=23 // pred_region
          %139 = dma.done %s131, 128
        $region28: #{tpu_custom_call.1} parent=23 // pred_fallthru
          _
        %s140 = sand.u32 %s40, 1
        %s141 = scalar_lea.sflag [#allocation3], %s140
        %s142 = sand.u32 %s40, 1
        %s143 = smul.addr %s142, 8
        %s144 = scalar_lea.vmem [#allocation2], %s143
        %p145 = pneg %p53
        %p146 = pneg %p50
        %p147 = pneg %p81
        %p148 = pneg %p78
        %s149 = sand.u32 %s68, 1
        %s150 = scalar_lea.sflag [#allocation4], %s149
        %s151 = sand.u32 %s68, 1
        %s152 = smul.addr %s151, 8
        %s153 = scalar_lea.vmem [#allocation5], %s152
        %v154 = vld [vmem:[%s134] sm:$0x3]
        %v155 = vmul.f32 %v154, %v154
        %s156 = scalar_lea.vmem %s134, 2 [#allocation2]
        %v157 = vld [vmem:[%s156] sm:$0x3]
        %v158 = vmul.f32 %v157, %v157
        %v159 = vadd.f32 %v155, %v158
        %s160 = scalar_lea.vmem %s134, 4 [#allocation2]
        %v161 = vld [vmem:[%s160] sm:$0x3]
        %v162 = vmul.f32 %v161, %v161
        %v163 = vadd.f32 %v159, %v162
        %s164 = scalar_lea.vmem %s134, 6 [#allocation2]
        %v165 = vld [vmem:[%s164] sm:$0x3]
        %v166 = vmul.f32 %v165, %v165
        %v167 = vadd.f32 %v163, %v166
        %v168 = vrsqrt.pop %v167
        %v169 = vmul.f32 %v168, %v167
        %v170 = vmul.f32 %v169, %v168
        %v171 = vmul.f32 0.5, %v170
        %v172 = vsub.f32 1.5, %v171
        %v173 = vmul.f32 %v168, %v172
        %vm174 = vweird.f32 %v167
        %vm175 = vweird.f32 %v168
        %vm176 = vmor %vm174, %vm175
        %v177 = vsel %vm176, %v168, %v173
        %v178 = vmul.f32 %v154, %v177
        %179 = vst [vmem:[%s153] sm:$0x3] %v178
        %v180 = vld [vmem:[%s156] sm:$0x3]
        %v181 = vmul.f32 %v180, %v177
        %s182 = scalar_lea.vmem %s153, 2 [#allocation5]
        %183 = vst [vmem:[%s182] sm:$0x3] %v181
        %v184 = vld [vmem:[%s160] sm:$0x3]
        %v185 = vmul.f32 %v184, %v177
        %s186 = scalar_lea.vmem %s153, 4 [#allocation5]
        %187 = vst [vmem:[%s186] sm:$0x3] %v185
        %v188 = vld [vmem:[%s164] sm:$0x3]
        %v189 = vmul.f32 %v188, %v177
        %s190 = scalar_lea.vmem %s153, 6 [#allocation5]
        %191 = vst [vmem:[%s190] sm:$0x3] %v189
        %s192 = sand.u32 %s68, 1
        %s193 = scalar_lea.sflag [#allocation4], %s192
        %s194 = sand.u32 %s68, 1
        %s195 = smul.addr %s194, 8
        %s196 = scalar_lea.vmem [#allocation5], %s195
        // Predicated region
        $region29: #{tpu_custom_call.1} parent=23 // pred_check
          %p197 = pneg %p78
        $region30: #{tpu_custom_call.1} parent=23 // pred_check_branch
          %199 = sbr.rel (%p197) target = $region32
        $region31: #{tpu_custom_call.1} parent=23 // pred_region
          %201 = vsyncadd %s193, 0
          %s202 = smul.addr %s22, 4
          %s203 = sadd.s32 %s23, %s202
          %s204 = smul.addr %s203, 2
          %s205 = scalar_lea.hbm %s1, %s204
          %s206 = sshll.u32 %s196, 4
          %s207 = int_to_ptr.vmem [resolvable:$true] %s206
          %s208 = sshll.u32 %s205, 4
          %s209 = int_to_ptr.hbm [resolvable:$true] %s208
          %214 = dma.vmem_to_hbm [thread:$0]  %s207, 128, %s209, %s193, 32, 32, 2
        $region32: #{tpu_custom_call.1} parent=23 // pred_fallthru
          _
      $region24: #{tpu_custom_call.1} parent=5 // pred_fallthru
        _
      %p215 = scmp.le.s32.totalorder 2, %s13
      // Predicated region
      $region33: #{tpu_custom_call.1} parent=5 // pred_check
        %p216 = pneg %p215
      $region34: #{tpu_custom_call.1} parent=5 // pred_check_branch
        %218 = sbr.rel (%p216) target = $region36
      $region35: #{tpu_custom_call.1} parent=5 // pred_region
        %s219 = ssub.s32 %s13, 2
        // Predicated region
        $region37: #{tpu_custom_call.1} parent=35 // pred_check
          %p220 = pneg %p84
        $region38: #{tpu_custom_call.1} parent=35 // pred_check_branch
          %222 = sbr.rel (%p220) target = $region40
        $region39: #{tpu_custom_call.1} parent=35 // pred_region
          %s223 = sand.u32 %s69, 1
          %s224 = scalar_lea.sflag [#allocation4], %s223
          %s225 = sand.u32 %s69, 1
          %s226 = smul.addr %s225, 8
          %s227 = scalar_lea.vmem [#allocation5], %s226
          %229 = dma.done %s224, 128
        $region40: #{tpu_custom_call.1} parent=35 // pred_fallthru
          _
      $region36: #{tpu_custom_call.1} parent=5 // pred_fallthru
        _
    $region6: #{tpu_custom_call.1} parent=1 // loop_footer
      %s17 = sadd.s32 1, %s13
    $region7: #{tpu_custom_call.1} parent=1 // loop_footer_branch
      %12 = sbr.rel target = $region3
    $region8: #{tpu_custom_call.1} parent=1 // loop_exit
      _
    %230 = vsyncpa [#allocation3], 1
    %s231 = scalar_lea.sflag [#allocation3], 1
    %232 = vsyncpa %s231, 1
    %233 = vsyncpa [#allocation4], 1
    %s234 = scalar_lea.sflag [#allocation4], 1
    %235 = vsyncpa %s234, 1

</llo_original>
